<compile_context>
chip_gen: v5e
topology: v5e:2x2
jax: 0.10.0
libtpu: 0.0.40
codegen_flags: <defaults>
</compile_context>

<pallas_src>
import math

import jax
import jax.numpy as jnp
from jax.experimental import pallas as pl
from jax.experimental.pallas import tpu as pltpu

# ----------------------------- problem sizes ------------------------------
S = 8             # sequence length
B = 2             # batch
E = 32            # d_model
NHEAD = 4
DH = E // NHEAD   # 8
FF = 64           # dim_feedforward
EPS = 1e-5
R = S * B         # total rows; seq-first flattening: row = s * B + b
NEG = -1e30       # additive mask value for cross-batch attention pairs

WCOLS = max(2 * E, FF)        # 64 lanes for both packed slabs
W_ROWS = 4 * E + FF           # 192 rows of packed weights
P_ROWS = 8 + R                # 8 bias/scale rows + (R, R) additive mask


# ------------------------------- kernel -----------------------------------
def encoder_layer_kernel(act_ref, w_ref, p_ref, out_ref):
    # Single invocation: whole problem resident in VMEM.
    x = act_ref[0:R, :]                       # (R, E) f32  (src rows, row = s*B + b)
    pos = act_ref[R:2 * R, :]                 # (R, E) f32
    qk_in = x + pos                           # q = k = src + pos  (f32)

    x16 = x.astype(jnp.bfloat16)
    qk16 = qk_in.astype(jnp.bfloat16)

    # ---- fused Q|K in-projection (softmax scale folded into Wq / bq) ----
    qk = jnp.dot(qk16, w_ref[0:E, 0:2 * E],
                 preferred_element_type=jnp.float32)          # (R, 2E) = [q | k]
    qk = qk + p_ref[0:1, 0:2 * E]                             # [bq*scale | 0]; bk dropped
    v = jnp.dot(x16, w_ref[E:2 * E, 0:E],
                preferred_element_type=jnp.float32) + p_ref[1:2, 0:E]   # (R, E)

    # Additive same-batch mask, precomputed on the host (0 / NEG).
    mask = p_ref[8:8 + R, 0:R]                                # (R, R) f32

    # ---- per-head attention core (tiny: R=16, DH=8) ----
    ctx_heads = []
    for h in range(NHEAD):
        qh = qk[:, h * DH:(h + 1) * DH]                       # (R, DH)
        kh = qk[:, E + h * DH:E + (h + 1) * DH]               # (R, DH)
        vh = v[:, h * DH:(h + 1) * DH]                        # (R, DH)
        s = jax.lax.dot_general(qh, kh, (((1,), (1,)), ((), ())),
                                preferred_element_type=jnp.float32)     # (R, R)
        s = s + mask
        s = s - jnp.max(s, axis=-1, keepdims=True)
        p = jnp.exp(s)
        c = jnp.dot(p, vh, preferred_element_type=jnp.float32)          # (R, DH)
        # flash-style epilogue: normalize the (R, DH) context, not the (R, R) probs
        c = c * pl.reciprocal(jnp.sum(p, axis=-1, keepdims=True), approx=True)
        ctx_heads.append(c)
    ctx = jnp.concatenate(ctx_heads, axis=1)                  # (R, E) head-concat

    # ---- output projection (single 2-D matmul) + bo ----
    attn = jnp.dot(ctx.astype(jnp.bfloat16), w_ref[2 * E:3 * E, 0:E],
                   preferred_element_type=jnp.float32) + p_ref[1:2, E:2 * E]

    # ---- residual + LayerNorm1 (dropout1 = identity) ----
    y = x + attn
    mu = jnp.mean(y, axis=-1, keepdims=True)
    var = jnp.mean((y - mu) ** 2, axis=-1, keepdims=True)
    y = (y - mu) * jax.lax.rsqrt(var + EPS) * p_ref[2:3, 0:E] + p_ref[2:3, E:2 * E]

    # ---- feed-forward: linear1 -> relu -> linear2 (dropouts = identity) ----
    h1 = jnp.dot(y.astype(jnp.bfloat16), w_ref[3 * E:4 * E, 0:FF],
                 preferred_element_type=jnp.float32) + p_ref[4:5, 0:FF]
    h1 = jnp.maximum(h1, 0.0)
    ff = jnp.dot(h1.astype(jnp.bfloat16), w_ref[4 * E:4 * E + FF, 0:E],
                 preferred_element_type=jnp.float32) + p_ref[5:6, 0:E]

    # ---- residual + LayerNorm2 ----
    z = y + ff
    mu2 = jnp.mean(z, axis=-1, keepdims=True)
    var2 = jnp.mean((z - mu2) ** 2, axis=-1, keepdims=True)
    out_ref[...] = ((z - mu2) * jax.lax.rsqrt(var2 + EPS)
                    * p_ref[3:4, 0:E] + p_ref[3:4, E:2 * E])


# --------------------------- parameter packing ------------------------------
def prepare_params(raw):
    """Pack PyTorch-convention weights into two contiguous slabs (bf16 weights, f32 params)."""
    in_w, in_b = raw["in_proj_w"], raw["in_proj_b"]        # (3E, E), (3E,)
    wq_t = in_w[0 * E:1 * E].T                             # x @ wq_t == x @ Wq.T
    wk_t = in_w[1 * E:2 * E].T
    wv_t = in_w[2 * E:3 * E].T
    bq = in_b[0 * E:1 * E]
    bv = in_b[2 * E:3 * E]                                 # bk unused (softmax-invariant)
    scale = 1.0 / math.sqrt(DH)

    # Weight slab (bf16), row-blocked, 64 lanes wide:
    #   [0:E)        [wq*scale | wk]   (E, 2E)
    #   [E:2E)       wv                (E, E)
    #   [2E:3E)      wo (out_proj_w.T) (E, E)
    #   [3E:4E)      w1 (lin1_w.T)     (E, FF)
    #   [4E:4E+FF)   w2 (lin2_w.T)     (FF, E)
    w_slab = jnp.zeros((W_ROWS, WCOLS), jnp.float32)
    w_slab = w_slab.at[0:E, 0:E].set(wq_t * scale)
    w_slab = w_slab.at[0:E, E:2 * E].set(wk_t)
    w_slab = w_slab.at[E:2 * E, 0:E].set(wv_t)
    w_slab = w_slab.at[2 * E:3 * E, 0:E].set(raw["out_proj_w"].T)
    w_slab = w_slab.at[3 * E:4 * E, 0:FF].set(raw["lin1_w"].T)
    w_slab = w_slab.at[4 * E:4 * E + FF, 0:E].set(raw["lin2_w"].T)
    w_slab = w_slab.astype(jnp.bfloat16)

    # Params slab (f32): biases / LN params + additive same-batch mask.
    p_slab = jnp.zeros((P_ROWS, WCOLS), jnp.float32)
    p_slab = p_slab.at[0, 0:E].set(bq * scale)             # row 0: [bq*scale | 0]
    p_slab = p_slab.at[1, 0:E].set(bv)                     # row 1: [bv | bo]
    p_slab = p_slab.at[1, E:2 * E].set(raw["out_proj_b"])
    p_slab = p_slab.at[2, 0:E].set(raw["ln1_g"])           # row 2: [g1 | b1]
    p_slab = p_slab.at[2, E:2 * E].set(raw["ln1_b"])
    p_slab = p_slab.at[3, 0:E].set(raw["ln2_g"])           # row 3: [g2 | b2]
    p_slab = p_slab.at[3, E:2 * E].set(raw["ln2_b"])
    p_slab = p_slab.at[4, 0:FF].set(raw["lin1_b"])         # row 4: lin1 bias (FF wide)
    p_slab = p_slab.at[5, 0:E].set(raw["lin2_b"])          # row 5: lin2 bias

    # Additive mask for the (s*B + b) flattened row order: allow within-batch pairs only.
    r_ids = jnp.arange(R)
    same_batch = (r_ids[:, None] % B) == (r_ids[None, :] % B)
    mask = jnp.where(same_batch, 0.0, NEG).astype(jnp.float32)
    p_slab = p_slab.at[8:8 + R, 0:R].set(mask)

    return {"w_slab": w_slab, "p_slab": p_slab}


# ------------------------------ wrapper ------------------------------------
@jax.jit
def transformer_encoder_layer(src_sbe, pos_sbe, kp):
    """src_sbe, pos_sbe: (S, B, E) float32.  Returns (S, B, E)."""
    # Seq-first (S, B, E) flattens to (S*B, E) for free; stack src and pos into
    # one activation slab so the kernel has 3 operands total.
    act = jnp.concatenate([src_sbe.reshape(R, E), pos_sbe.reshape(R, E)], axis=0)

    vmem = pl.BlockSpec(memory_space=pltpu.MemorySpace.VMEM)
    out_rows = pl.pallas_call(
        encoder_layer_kernel,
        out_shape=jax.ShapeDtypeStruct((R, E), jnp.float32),
        in_specs=[vmem, vmem, vmem],
        out_specs=vmem,
    )(act, kp["w_slab"], kp["p_slab"])

    return out_rows.reshape(S, B, E)


# -------------------------- pure-JAX reference -----------------------------
def reference(src_sbe, pos_sbe, raw):
    x = jnp.transpose(src_sbe, (1, 0, 2))   # (B, S, E)
    pos = jnp.transpose(pos_sbe, (1, 0, 2))
    in_w, in_b = raw["in_proj_w"], raw["in_proj_b"]
    qk = x + pos
    q = qk @ in_w[0:E].T + in_b[0:E]
    k = qk @ in_w[E:2 * E].T + in_b[E:2 * E]
    v = x @ in_w[2 * E:].T + in_b[2 * E:]

    def heads(t):  # (B,S,E) -> (B,H,S,DH)
        return t.reshape(B, S, NHEAD, DH).transpose(0, 2, 1, 3)

    qh = heads(q) / math.sqrt(DH)
    kh, vh = heads(k), heads(v)
    scores = jnp.einsum("bhsd,bhtd->bhst", qh, kh)
    p = jax.nn.softmax(scores, axis=-1)
    attn = jnp.einsum("bhst,bhtd->bhsd", p, vh).transpose(0, 2, 1, 3).reshape(B, S, E)
    attn = attn @ raw["out_proj_w"].T + raw["out_proj_b"]

    def ln(t, g, b):
        mu = jnp.mean(t, -1, keepdims=True)
        var = jnp.mean((t - mu) ** 2, -1, keepdims=True)
        return (t - mu) / jnp.sqrt(var + EPS) * g + b

    y = ln(x + attn, raw["ln1_g"], raw["ln1_b"])
    ff = (jnp.maximum(y @ raw["lin1_w"].T + raw["lin1_b"], 0.0)
          @ raw["lin2_w"].T + raw["lin2_b"])
    z = ln(y + ff, raw["ln2_g"], raw["ln2_b"])
    return z.transpose(1, 0, 2)


# ------------------------------- main --------------------------------------
if __name__ == "__main__":
    key = jax.random.PRNGKey(0)
    ks = jax.random.split(key, 14)

    # PyTorch-convention parameter shapes.
    raw = {
        "in_proj_w": 0.05 * jax.random.normal(ks[0], (3 * E, E), jnp.float32),
        "in_proj_b": 0.05 * jax.random.normal(ks[1], (3 * E,), jnp.float32),
        "out_proj_w": 0.05 * jax.random.normal(ks[2], (E, E), jnp.float32),
        "out_proj_b": 0.05 * jax.random.normal(ks[3], (E,), jnp.float32),
        "lin1_w": 0.05 * jax.random.normal(ks[4], (FF, E), jnp.float32),
        "lin1_b": 0.05 * jax.random.normal(ks[5], (FF,), jnp.float32),
        "lin2_w": 0.05 * jax.random.normal(ks[6], (E, FF), jnp.float32),
        "lin2_b": 0.05 * jax.random.normal(ks[7], (E,), jnp.float32),
        "ln1_g": 1.0 + 0.1 * jax.random.normal(ks[8], (E,), jnp.float32),
        "ln1_b": 0.05 * jax.random.normal(ks[9], (E,), jnp.float32),
        "ln2_g": 1.0 + 0.1 * jax.random.normal(ks[10], (E,), jnp.float32),
        "ln2_b": 0.05 * jax.random.normal(ks[11], (E,), jnp.float32),
    }

    src = jax.random.normal(ks[12], (S, B, E), jnp.float32)
    pos = 0.1 * jax.random.normal(ks[13], (S, B, E), jnp.float32)

    kp = prepare_params(raw)
    out = transformer_encoder_layer(src, pos, kp)
    out = jax.block_until_ready(out)

    ref = reference(src, pos, raw)
    assert out.shape == (S, B, E)
    # Tolerance accounts for bf16 matmul operands (f32 MXU accumulation) and the
    # approximate EUP reciprocal in the softmax epilogue; residual + LayerNorm
    # structure keeps the error well below this inference-grade bound.
    assert jnp.allclose(out, ref, atol=1e-2, rtol=1e-2), "mismatch vs JAX reference"

    print("KERNEL_OK")
</pallas_src>

<mosaic_0001>
module attributes {stable_mosaic.version = 11 : i64} {
  func.func @encoder_layer_kernel(%arg0: memref<32x32xf32, #tpu.memory_space<vmem>>, %arg1: memref<192x64xbf16, #tpu.memory_space<vmem>>, %arg2: memref<24x64xf32, #tpu.memory_space<vmem>>, %arg3: memref<16x32xf32, #tpu.memory_space<vmem>>) attributes {dimension_semantics = [], scalar_prefetch = 0 : i64, scratch_operands = 0 : i64, tpu.core_type = #tpu.core_type<tc>} {
    %c0 = arith.constant 0 : index
    %c0_0 = arith.constant 0 : index
    %0 = vector.load %arg0[%c0, %c0_0] : memref<32x32xf32, #tpu.memory_space<vmem>>, vector<16x32xf32>
    %c16 = arith.constant 16 : index
    %c0_1 = arith.constant 0 : index
    %1 = vector.load %arg0[%c16, %c0_1] : memref<32x32xf32, #tpu.memory_space<vmem>>, vector<16x32xf32>
    %2 = arith.addf %0, %1 : vector<16x32xf32>
    %3 = arith.truncf %0 : vector<16x32xf32> to vector<16x32xbf16>
    %4 = arith.truncf %2 : vector<16x32xf32> to vector<16x32xbf16>
    %c0_2 = arith.constant 0 : index
    %c0_3 = arith.constant 0 : index
    %5 = vector.load %arg1[%c0_2, %c0_3] : memref<192x64xbf16, #tpu.memory_space<vmem>>, vector<32x64xbf16>
    %cst = arith.constant dense<0.000000e+00> : vector<16x64xf32>
    %6 = tpu.matmul %4, %5, %cst {dimension_numbers = #tpu.dot_dimension_numbers<[1], [0], [0], [1], [0, 0, 1, 1], [], []>} : vector<16x32xbf16>, vector<32x64xbf16>, vector<16x64xf32> -> vector<16x64xf32>
    %c0_4 = arith.constant 0 : index
    %c0_5 = arith.constant 0 : index
    %7 = vector.load %arg2[%c0_4, %c0_5] : memref<24x64xf32, #tpu.memory_space<vmem>>, vector<1x64xf32>
    %8 = vector.broadcast %7 : vector<1x64xf32> to vector<16x64xf32>
    %9 = arith.addf %6, %8 : vector<16x64xf32>
    %c32 = arith.constant 32 : index
    %c0_6 = arith.constant 0 : index
    %10 = vector.load %arg1[%c32, %c0_6] : memref<192x64xbf16, #tpu.memory_space<vmem>>, vector<32x32xbf16>
    %cst_7 = arith.constant dense<0.000000e+00> : vector<16x32xf32>
    %11 = tpu.matmul %3, %10, %cst_7 {dimension_numbers = #tpu.dot_dimension_numbers<[1], [0], [0], [1], [0, 0, 1, 1], [], []>} : vector<16x32xbf16>, vector<32x32xbf16>, vector<16x32xf32> -> vector<16x32xf32>
    %c1 = arith.constant 1 : index
    %c0_8 = arith.constant 0 : index
    %12 = vector.load %arg2[%c1, %c0_8] : memref<24x64xf32, #tpu.memory_space<vmem>>, vector<1x32xf32>
    %13 = vector.broadcast %12 : vector<1x32xf32> to vector<16x32xf32>
    %14 = arith.addf %11, %13 : vector<16x32xf32>
    %c8 = arith.constant 8 : index
    %c0_9 = arith.constant 0 : index
    %15 = vector.load %arg2[%c8, %c0_9] : memref<24x64xf32, #tpu.memory_space<vmem>>, vector<16x16xf32>
    %16 = vector.extract_strided_slice %9 {offsets = [0, 0], sizes = [16, 8], strides = [1, 1]} : vector<16x64xf32> to vector<16x8xf32>
    %17 = vector.extract_strided_slice %9 {offsets = [0, 32], sizes = [16, 8], strides = [1, 1]} : vector<16x64xf32> to vector<16x8xf32>
    %18 = vector.extract_strided_slice %14 {offsets = [0, 0], sizes = [16, 8], strides = [1, 1]} : vector<16x32xf32> to vector<16x8xf32>
    %cst_10 = arith.constant dense<0.000000e+00> : vector<16x16xf32>
    %19 = tpu.matmul %16, %17, %cst_10 {dimension_numbers = #tpu.dot_dimension_numbers<[1], [1], [0], [0], [0, 0, 1, 0], [], []>} : vector<16x8xf32>, vector<16x8xf32>, vector<16x16xf32> -> vector<16x16xf32>
    %20 = arith.addf %19, %15 : vector<16x16xf32>
    %cst_11 = arith.constant dense<0xFF800000> : vector<16xf32>
    %21 = vector.multi_reduction <maximumf>, %20, %cst_11 [1] : vector<16x16xf32> to vector<16xf32>
    %22 = vector.shape_cast %21 : vector<16xf32> to vector<16x1xf32>
    %23 = vector.broadcast %22 : vector<16x1xf32> to vector<16x16xf32>
    %24 = arith.subf %20, %23 : vector<16x16xf32>
    %25 = math.exp %24 : vector<16x16xf32>
    %cst_12 = arith.constant dense<0.000000e+00> : vector<16x8xf32>
    %26 = tpu.matmul %25, %18, %cst_12 {dimension_numbers = #tpu.dot_dimension_numbers<[1], [0], [0], [1], [0, 0, 1, 1], [], []>} : vector<16x16xf32>, vector<16x8xf32>, vector<16x8xf32> -> vector<16x8xf32>
    %cst_13 = arith.constant dense<0.000000e+00> : vector<16xf32>
    %27 = vector.multi_reduction <add>, %25, %cst_13 [1] : vector<16x16xf32> to vector<16xf32>
    %28 = vector.shape_cast %27 : vector<16xf32> to vector<16x1xf32>
    %29 = tpu.reciprocal %28 {approx = true} : vector<16x1xf32> -> vector<16x1xf32>
    %30 = vector.broadcast %29 : vector<16x1xf32> to vector<16x8xf32>
    %31 = arith.mulf %26, %30 : vector<16x8xf32>
    %32 = vector.extract_strided_slice %9 {offsets = [0, 8], sizes = [16, 8], strides = [1, 1]} : vector<16x64xf32> to vector<16x8xf32>
    %33 = vector.extract_strided_slice %9 {offsets = [0, 40], sizes = [16, 8], strides = [1, 1]} : vector<16x64xf32> to vector<16x8xf32>
    %34 = vector.extract_strided_slice %14 {offsets = [0, 8], sizes = [16, 8], strides = [1, 1]} : vector<16x32xf32> to vector<16x8xf32>
    %cst_14 = arith.constant dense<0.000000e+00> : vector<16x16xf32>
    %35 = tpu.matmul %32, %33, %cst_14 {dimension_numbers = #tpu.dot_dimension_numbers<[1], [1], [0], [0], [0, 0, 1, 0], [], []>} : vector<16x8xf32>, vector<16x8xf32>, vector<16x16xf32> -> vector<16x16xf32>
    %36 = arith.addf %35, %15 : vector<16x16xf32>
    %cst_15 = arith.constant dense<0xFF800000> : vector<16xf32>
    %37 = vector.multi_reduction <maximumf>, %36, %cst_15 [1] : vector<16x16xf32> to vector<16xf32>
    %38 = vector.shape_cast %37 : vector<16xf32> to vector<16x1xf32>
    %39 = vector.broadcast %38 : vector<16x1xf32> to vector<16x16xf32>
    %40 = arith.subf %36, %39 : vector<16x16xf32>
    %41 = math.exp %40 : vector<16x16xf32>
    %cst_16 = arith.constant dense<0.000000e+00> : vector<16x8xf32>
    %42 = tpu.matmul %41, %34, %cst_16 {dimension_numbers = #tpu.dot_dimension_numbers<[1], [0], [0], [1], [0, 0, 1, 1], [], []>} : vector<16x16xf32>, vector<16x8xf32>, vector<16x8xf32> -> vector<16x8xf32>
    %cst_17 = arith.constant dense<0.000000e+00> : vector<16xf32>
    %43 = vector.multi_reduction <add>, %41, %cst_17 [1] : vector<16x16xf32> to vector<16xf32>
    %44 = vector.shape_cast %43 : vector<16xf32> to vector<16x1xf32>
    %45 = tpu.reciprocal %44 {approx = true} : vector<16x1xf32> -> vector<16x1xf32>
    %46 = vector.broadcast %45 : vector<16x1xf32> to vector<16x8xf32>
    %47 = arith.mulf %42, %46 : vector<16x8xf32>
    %48 = vector.extract_strided_slice %9 {offsets = [0, 16], sizes = [16, 8], strides = [1, 1]} : vector<16x64xf32> to vector<16x8xf32>
    %49 = vector.extract_strided_slice %9 {offsets = [0, 48], sizes = [16, 8], strides = [1, 1]} : vector<16x64xf32> to vector<16x8xf32>
    %50 = vector.extract_strided_slice %14 {offsets = [0, 16], sizes = [16, 8], strides = [1, 1]} : vector<16x32xf32> to vector<16x8xf32>
    %cst_18 = arith.constant dense<0.000000e+00> : vector<16x16xf32>
    %51 = tpu.matmul %48, %49, %cst_18 {dimension_numbers = #tpu.dot_dimension_numbers<[1], [1], [0], [0], [0, 0, 1, 0], [], []>} : vector<16x8xf32>, vector<16x8xf32>, vector<16x16xf32> -> vector<16x16xf32>
    %52 = arith.addf %51, %15 : vector<16x16xf32>
    %cst_19 = arith.constant dense<0xFF800000> : vector<16xf32>
    %53 = vector.multi_reduction <maximumf>, %52, %cst_19 [1] : vector<16x16xf32> to vector<16xf32>
    %54 = vector.shape_cast %53 : vector<16xf32> to vector<16x1xf32>
    %55 = vector.broadcast %54 : vector<16x1xf32> to vector<16x16xf32>
    %56 = arith.subf %52, %55 : vector<16x16xf32>
    %57 = math.exp %56 : vector<16x16xf32>
    %cst_20 = arith.constant dense<0.000000e+00> : vector<16x8xf32>
    %58 = tpu.matmul %57, %50, %cst_20 {dimension_numbers = #tpu.dot_dimension_numbers<[1], [0], [0], [1], [0, 0, 1, 1], [], []>} : vector<16x16xf32>, vector<16x8xf32>, vector<16x8xf32> -> vector<16x8xf32>
    %cst_21 = arith.constant dense<0.000000e+00> : vector<16xf32>
    %59 = vector.multi_reduction <add>, %57, %cst_21 [1] : vector<16x16xf32> to vector<16xf32>
    %60 = vector.shape_cast %59 : vector<16xf32> to vector<16x1xf32>
    %61 = tpu.reciprocal %60 {approx = true} : vector<16x1xf32> -> vector<16x1xf32>
    %62 = vector.broadcast %61 : vector<16x1xf32> to vector<16x8xf32>
    %63 = arith.mulf %58, %62 : vector<16x8xf32>
    %64 = vector.extract_strided_slice %9 {offsets = [0, 24], sizes = [16, 8], strides = [1, 1]} : vector<16x64xf32> to vector<16x8xf32>
    %65 = vector.extract_strided_slice %9 {offsets = [0, 56], sizes = [16, 8], strides = [1, 1]} : vector<16x64xf32> to vector<16x8xf32>
    %66 = vector.extract_strided_slice %14 {offsets = [0, 24], sizes = [16, 8], strides = [1, 1]} : vector<16x32xf32> to vector<16x8xf32>
    %cst_22 = arith.constant dense<0.000000e+00> : vector<16x16xf32>
    %67 = tpu.matmul %64, %65, %cst_22 {dimension_numbers = #tpu.dot_dimension_numbers<[1], [1], [0], [0], [0, 0, 1, 0], [], []>} : vector<16x8xf32>, vector<16x8xf32>, vector<16x16xf32> -> vector<16x16xf32>
    %68 = arith.addf %67, %15 : vector<16x16xf32>
    %cst_23 = arith.constant dense<0xFF800000> : vector<16xf32>
    %69 = vector.multi_reduction <maximumf>, %68, %cst_23 [1] : vector<16x16xf32> to vector<16xf32>
    %70 = vector.shape_cast %69 : vector<16xf32> to vector<16x1xf32>
    %71 = vector.broadcast %70 : vector<16x1xf32> to vector<16x16xf32>
    %72 = arith.subf %68, %71 : vector<16x16xf32>
    %73 = math.exp %72 : vector<16x16xf32>
    %cst_24 = arith.constant dense<0.000000e+00> : vector<16x8xf32>
    %74 = tpu.matmul %73, %66, %cst_24 {dimension_numbers = #tpu.dot_dimension_numbers<[1], [0], [0], [1], [0, 0, 1, 1], [], []>} : vector<16x16xf32>, vector<16x8xf32>, vector<16x8xf32> -> vector<16x8xf32>
    %cst_25 = arith.constant dense<0.000000e+00> : vector<16xf32>
    %75 = vector.multi_reduction <add>, %73, %cst_25 [1] : vector<16x16xf32> to vector<16xf32>
    %76 = vector.shape_cast %75 : vector<16xf32> to vector<16x1xf32>
    %77 = tpu.reciprocal %76 {approx = true} : vector<16x1xf32> -> vector<16x1xf32>
    %78 = vector.broadcast %77 : vector<16x1xf32> to vector<16x8xf32>
    %79 = arith.mulf %74, %78 : vector<16x8xf32>
    %80 = tpu.concatenate %31, %47, %63, %79 in 1 : vector<16x8xf32>, vector<16x8xf32>, vector<16x8xf32>, vector<16x8xf32> -> vector<16x32xf32>
    %81 = arith.truncf %80 : vector<16x32xf32> to vector<16x32xbf16>
    %c64 = arith.constant 64 : index
    %c0_26 = arith.constant 0 : index
    %82 = vector.load %arg1[%c64, %c0_26] : memref<192x64xbf16, #tpu.memory_space<vmem>>, vector<32x32xbf16>
    %cst_27 = arith.constant dense<0.000000e+00> : vector<16x32xf32>
    %83 = tpu.matmul %81, %82, %cst_27 {dimension_numbers = #tpu.dot_dimension_numbers<[1], [0], [0], [1], [0, 0, 1, 1], [], []>} : vector<16x32xbf16>, vector<32x32xbf16>, vector<16x32xf32> -> vector<16x32xf32>
    %c1_28 = arith.constant 1 : index
    %c32_29 = arith.constant 32 : index
    %84 = vector.load %arg2[%c1_28, %c32_29] : memref<24x64xf32, #tpu.memory_space<vmem>>, vector<1x32xf32>
    %85 = vector.broadcast %84 : vector<1x32xf32> to vector<16x32xf32>
    %86 = arith.addf %83, %85 : vector<16x32xf32>
    %87 = arith.addf %0, %86 : vector<16x32xf32>
    %cst_30 = arith.constant dense<0.000000e+00> : vector<16xf32>
    %88 = vector.multi_reduction <add>, %87, %cst_30 [1] : vector<16x32xf32> to vector<16xf32>
    %89 = vector.shape_cast %88 : vector<16xf32> to vector<16x1xf32>
    %cst_31 = arith.constant 3.200000e+01 : f32
    %90 = vector.broadcast %cst_31 : f32 to vector<16x1xf32>
    %91 = arith.divf %89, %90 : vector<16x1xf32>
    %92 = vector.broadcast %91 : vector<16x1xf32> to vector<16x32xf32>
    %93 = arith.subf %87, %92 : vector<16x32xf32>
    %94 = arith.mulf %93, %93 : vector<16x32xf32>
    %cst_32 = arith.constant dense<0.000000e+00> : vector<16xf32>
    %95 = vector.multi_reduction <add>, %94, %cst_32 [1] : vector<16x32xf32> to vector<16xf32>
    %96 = vector.shape_cast %95 : vector<16xf32> to vector<16x1xf32>
    %cst_33 = arith.constant 3.200000e+01 : f32
    %97 = vector.broadcast %cst_33 : f32 to vector<16x1xf32>
    %98 = arith.divf %96, %97 : vector<16x1xf32>
    %99 = vector.broadcast %91 : vector<16x1xf32> to vector<16x32xf32>
    %100 = arith.subf %87, %99 : vector<16x32xf32>
    %cst_34 = arith.constant 9.99999974E-6 : f32
    %101 = vector.broadcast %cst_34 : f32 to vector<16x1xf32>
    %102 = arith.addf %98, %101 : vector<16x1xf32>
    %103 = math.rsqrt %102 : vector<16x1xf32>
    %104 = vector.broadcast %103 : vector<16x1xf32> to vector<16x32xf32>
    %105 = arith.mulf %100, %104 : vector<16x32xf32>
    %c2 = arith.constant 2 : index
    %c0_35 = arith.constant 0 : index
    %106 = vector.load %arg2[%c2, %c0_35] : memref<24x64xf32, #tpu.memory_space<vmem>>, vector<1x32xf32>
    %107 = vector.broadcast %106 : vector<1x32xf32> to vector<16x32xf32>
    %108 = arith.mulf %105, %107 : vector<16x32xf32>
    %c2_36 = arith.constant 2 : index
    %c32_37 = arith.constant 32 : index
    %109 = vector.load %arg2[%c2_36, %c32_37] : memref<24x64xf32, #tpu.memory_space<vmem>>, vector<1x32xf32>
    %110 = vector.broadcast %109 : vector<1x32xf32> to vector<16x32xf32>
    %111 = arith.addf %108, %110 : vector<16x32xf32>
    %112 = arith.truncf %111 : vector<16x32xf32> to vector<16x32xbf16>
    %c96 = arith.constant 96 : index
    %c0_38 = arith.constant 0 : index
    %113 = vector.load %arg1[%c96, %c0_38] : memref<192x64xbf16, #tpu.memory_space<vmem>>, vector<32x64xbf16>
    %cst_39 = arith.constant dense<0.000000e+00> : vector<16x64xf32>
    %114 = tpu.matmul %112, %113, %cst_39 {dimension_numbers = #tpu.dot_dimension_numbers<[1], [0], [0], [1], [0, 0, 1, 1], [], []>} : vector<16x32xbf16>, vector<32x64xbf16>, vector<16x64xf32> -> vector<16x64xf32>
    %c4 = arith.constant 4 : index
    %c0_40 = arith.constant 0 : index
    %115 = vector.load %arg2[%c4, %c0_40] : memref<24x64xf32, #tpu.memory_space<vmem>>, vector<1x64xf32>
    %116 = vector.broadcast %115 : vector<1x64xf32> to vector<16x64xf32>
    %117 = arith.addf %114, %116 : vector<16x64xf32>
    %cst_41 = arith.constant 0.000000e+00 : f32
    %118 = vector.broadcast %cst_41 : f32 to vector<16x64xf32>
    %119 = arith.maximumf %117, %118 : vector<16x64xf32>
    %120 = arith.truncf %119 : vector<16x64xf32> to vector<16x64xbf16>
    %c128 = arith.constant 128 : index
    %c0_42 = arith.constant 0 : index
    %121 = vector.load %arg1[%c128, %c0_42] : memref<192x64xbf16, #tpu.memory_space<vmem>>, vector<64x32xbf16>
    %cst_43 = arith.constant dense<0.000000e+00> : vector<16x32xf32>
    %122 = tpu.matmul %120, %121, %cst_43 {dimension_numbers = #tpu.dot_dimension_numbers<[1], [0], [0], [1], [0, 0, 1, 1], [], []>} : vector<16x64xbf16>, vector<64x32xbf16>, vector<16x32xf32> -> vector<16x32xf32>
    %c5 = arith.constant 5 : index
    %c0_44 = arith.constant 0 : index
    %123 = vector.load %arg2[%c5, %c0_44] : memref<24x64xf32, #tpu.memory_space<vmem>>, vector<1x32xf32>
    %124 = vector.broadcast %123 : vector<1x32xf32> to vector<16x32xf32>
    %125 = arith.addf %122, %124 : vector<16x32xf32>
    %126 = arith.addf %111, %125 : vector<16x32xf32>
    %cst_45 = arith.constant dense<0.000000e+00> : vector<16xf32>
    %127 = vector.multi_reduction <add>, %126, %cst_45 [1] : vector<16x32xf32> to vector<16xf32>
    %128 = vector.shape_cast %127 : vector<16xf32> to vector<16x1xf32>
    %cst_46 = arith.constant 3.200000e+01 : f32
    %129 = vector.broadcast %cst_46 : f32 to vector<16x1xf32>
    %130 = arith.divf %128, %129 : vector<16x1xf32>
    %131 = vector.broadcast %130 : vector<16x1xf32> to vector<16x32xf32>
    %132 = arith.subf %126, %131 : vector<16x32xf32>
    %133 = arith.mulf %132, %132 : vector<16x32xf32>
    %cst_47 = arith.constant dense<0.000000e+00> : vector<16xf32>
    %134 = vector.multi_reduction <add>, %133, %cst_47 [1] : vector<16x32xf32> to vector<16xf32>
    %135 = vector.shape_cast %134 : vector<16xf32> to vector<16x1xf32>
    %cst_48 = arith.constant 3.200000e+01 : f32
    %136 = vector.broadcast %cst_48 : f32 to vector<16x1xf32>
    %137 = arith.divf %135, %136 : vector<16x1xf32>
    %138 = vector.broadcast %130 : vector<16x1xf32> to vector<16x32xf32>
    %139 = arith.subf %126, %138 : vector<16x32xf32>
    %cst_49 = arith.constant 9.99999974E-6 : f32
    %140 = vector.broadcast %cst_49 : f32 to vector<16x1xf32>
    %141 = arith.addf %137, %140 : vector<16x1xf32>
    %142 = math.rsqrt %141 : vector<16x1xf32>
    %143 = vector.broadcast %142 : vector<16x1xf32> to vector<16x32xf32>
    %144 = arith.mulf %139, %143 : vector<16x32xf32>
    %c3 = arith.constant 3 : index
    %c0_50 = arith.constant 0 : index
    %145 = vector.load %arg2[%c3, %c0_50] : memref<24x64xf32, #tpu.memory_space<vmem>>, vector<1x32xf32>
    %146 = vector.broadcast %145 : vector<1x32xf32> to vector<16x32xf32>
    %147 = arith.mulf %144, %146 : vector<16x32xf32>
    %c3_51 = arith.constant 3 : index
    %c32_52 = arith.constant 32 : index
    %148 = vector.load %arg2[%c3_51, %c32_52] : memref<24x64xf32, #tpu.memory_space<vmem>>, vector<1x32xf32>
    %149 = vector.broadcast %148 : vector<1x32xf32> to vector<16x32xf32>
    %150 = arith.addf %147, %149 : vector<16x32xf32>
    %c0_53 = arith.constant 0 : index
    %c0_54 = arith.constant 0 : index
    %151 = vector.load %arg3[%c0_53, %c0_54] : memref<16x32xf32, #tpu.memory_space<vmem>>, vector<16x32xf32>
    tpu.vector_store %arg3[%c0_53, %c0_54], %150 {strides = array<i32>} : memref<16x32xf32, #tpu.memory_space<vmem>>, vector<16x32xf32>,
    return
  }
}

</mosaic_0001>

<llo_original>
// kernel: transformer_encoder_layer.1
$region0: #{transformer_encoder_layer.1}
  #allocation0 [shape = 'u32[]', space=smem, size = 0x4, offset = 0x4, fixed_abs, tag = 'smem constant byte address 0x4 - core index']
  #allocation1 [shape = 'u32[72,128]{1,0:T(1,128)}', space=vmem, size = 0x9000, scoped, tag = 'internal scratch']
  %s0 = inlined_call_operand.vmem [shape: f32[32,32], index: 0, kind: input, shape index: {}]
  %s1 = inlined_call_operand.vmem [shape: bf16[192,64], index: 1, kind: input, shape index: {}]
  %s2 = inlined_call_operand.vmem [shape: f32[24,64], index: 2, kind: input, shape index: {}]
  %s3 = inlined_call_operand.hbm [shape: f32[16,32], index: 3, kind: output, shape index: {}]
  %s4 = sld [smem:[#allocation0]]
  $region22: #{transformer_encoder_layer.1} parent=0
    _
  %s6 = ssub.s32 1, %s4
  %s7 = scalar_select 0, %s6, %s4
  $region1: #{transformer_encoder_layer.1} parent=0
    #allocation2 [shape = 'u8[8192]{0}', space=vmem, size = 0x2000, scoped, tag = 'output window, operand 0, single buffered']
    #allocation3 [shape = 's32[1]{0}', space=sflag, size = 0x4, scoped, tag = 'scoped memory for transformer_encoder_layer.1']
    %8 = vsyncpa [#allocation3], 0
    // Predicated region
    $region2: #{transformer_encoder_layer.1} parent=1 // pred_check
      _
    $region3: #{transformer_encoder_layer.1} parent=1 // pred_check_branch
      %10 = sbr.rel (0) target = $region5
    $region4: #{transformer_encoder_layer.1} parent=1 // pred_region
      _
    $region5: #{transformer_encoder_layer.1} parent=1 // pred_fallthru
      _
    // Predicated region
    $region6: #{transformer_encoder_layer.1} parent=1 // pred_check
      _
    $region7: #{transformer_encoder_layer.1} parent=1 // pred_check_branch
      %12 = sbr.rel (0) target = $region9
    $region8: #{transformer_encoder_layer.1} parent=1 // pred_region
      _
    $region9: #{transformer_encoder_layer.1} parent=1 // pred_fallthru
      _
    // Predicated region
    $region10: #{transformer_encoder_layer.1} parent=1 // pred_check
      _
    $region11: #{transformer_encoder_layer.1} parent=1 // pred_check_branch
      %14 = sbr.rel (0) target = $region13
    $region12: #{transformer_encoder_layer.1} parent=1 // pred_region
      _
    $region13: #{transformer_encoder_layer.1} parent=1 // pred_fallthru
      _
    %v16 = vld [vmem:[%s0] sm:$0xff]
    %v17 = vld [vmem:[%s0 + $0x8] sm:$0xff]
    %v18 = vld [vmem:[%s0 + $0x10] sm:$0xff]
    %v19 = vld [vmem:[%s0 + $0x18] sm:$0xff]
    %v20 = vadd.f32 %v16, %v18
    %v21 = vadd.f32 %v17, %v19
    %v22 = vpack.c.bf16 %v17, %v16
    %v23 = vpack.c.bf16 %v21, %v20
    %v24 = vld [vmem:[%s1] sm:$0xf]
    %v25 = vld [vmem:[%s1 + $0x4] sm:$0xf]
    %v26 = vld [vmem:[%s1 + $0x8] sm:$0xf]
    %v27 = vld [vmem:[%s1 + $0xc] sm:$0xf]
    %v28 = vld [vmem:[%s2] sm:$0x1]
    %v29 = vperm.slane %v28, 0
    %v34 = vunpack.c.l.b16 %v24
    %v35 = vunpack.c.l.b16 %v25
    %v36 = vunpack.c.l.b16 %v26
    %v37 = vunpack.c.l.b16 %v27
    %v38 = vpack.c.b16 %v35, %v34
    %v39 = vpack.c.b16 %v37, %v36
    %vm42 = vcmask 261120
    %v44 = vsel %vm42, %v23, 0
    %46 = vmatpush.bf16.msra.mxu0 0
    %47 = vmatpush.bf16.msra.mxu0 0
    %48 = vmatpush.bf16.msra.mxu0 0
    %49 = vmatpush.bf16.msra.mxu0 0
    %50 = vmatpush.bf16.msra.mxu0 0
    %51 = vmatpush.bf16.msra.mxu0 0
    %52 = vmatpush.bf16.msra.mxu0 %v39
    %53 = vmatpush.bf16.msra.mxu0 %v38
    %54 = vmatmul.bf16.gmra.mxu0 %v44
    %v55 = vpop.f32.mrf.mxu0
    %v56 = vadd.f32 %v29, %v55
    %v57 = vpop.f32.mrf.mxu0
    %v58 = vadd.f32 %v29, %v57
    %59 = vdwg.mxu0
    %v60 = vld [vmem:[%s1 + $0x10] sm:$0xf]
    %v61 = vld [vmem:[%s1 + $0x14] sm:$0xf]
    %v62 = vld [vmem:[%s1 + $0x18] sm:$0xf]
    %v63 = vld [vmem:[%s1 + $0x1c] sm:$0xf]
    %v64 = vld [vmem:[%s2 + $0x1] sm:$0x1]
    %v65 = vperm.slane %v64, 0
    %v70 = vunpack.c.l.b16 %v60
    %v71 = vunpack.c.l.b16 %v61
    %v72 = vunpack.c.l.b16 %v62
    %v73 = vunpack.c.l.b16 %v63
    %v74 = vpack.c.b16 %v71, %v70
    %v75 = vpack.c.b16 %v73, %v72
    %v79 = vsel %vm42, %v22, 0
    %81 = vmatpush.bf16.msra.mxu0 0
    %82 = vmatpush.bf16.msra.mxu0 0
    %83 = vmatpush.bf16.msra.mxu0 0
    %84 = vmatpush.bf16.msra.mxu0 0
    %85 = vmatpush.bf16.msra.mxu0 0
    %86 = vmatpush.bf16.msra.mxu0 0
    %87 = vmatpush.bf16.msra.mxu0 %v75
    %88 = vmatpush.bf16.msra.mxu0 %v74
    %89 = vmatmul.bf16.gmra.mxu0 %v79
    %v90 = vpop.f32.mrf.mxu0
    %v91 = vadd.f32 %v65, %v90
    %v92 = vpop.f32.mrf.mxu0
    %v93 = vadd.f32 %v65, %v92
    %94 = vdwg.mxu0
    %v95 = vld [vmem:[%s2 + $0x8] sm:$0xff]
    %v96 = vld [vmem:[%s2 + $0x10] sm:$0xff]
    %99 = vrot.lane.b32.xlu0 %v56, 96
    %v100 = vpop.permute.xlu0 %99
    %101 = vrot.lane.b32.xlu0 %v58, 96
    %v102 = vpop.permute.xlu0 %101
    %vm103 = vcmask 64512
    %v104 = vsel %vm103, %v56, 0
    %v106 = vsel %vm103, %v58, 0
    %v108 = vsel %vm103, %v100, 0
    %v110 = vsel %vm103, %v102, 0
    %112 = vmatpush.xpose.msra.mxu0 0.0
    %113 = vmatpush.xpose.msra.mxu0 0.0
    %114 = vmatpush.xpose.msra.mxu0 0.0
    %115 = vmatpush.xpose.msra.mxu0 0.0
    %116 = vmatpush.xpose.msra.mxu0 0.0
    %117 = vmatpush.xpose.msra.mxu0 0.0
    %118 = vmatpush.xpose.msra.mxu0 0.0
    %119 = vmatpush.xpose.msra.mxu0 0.0
    %120 = vmatpush.xpose.msra.mxu0 0.0
    %121 = vmatpush.xpose.msra.mxu0 0.0
    %122 = vmatpush.xpose.msra.mxu0 0.0
    %123 = vmatpush.xpose.msra.mxu0 0.0
    %124 = vmatpush.xpose.msra.mxu0 0.0
    %125 = vmatpush.xpose.msra.mxu0 0.0
    %126 = vmatpush.xpose.msra.mxu0 %v110
    %127 = vmatpush.xpose.msra.mxu0 %v108
    %128 = vmatmul.f32.gmra.mxu0 %v104
    %v129 = vpop.f32.mrf.mxu0
    %v130 = vadd.f32 %v95, %v129
    %131 = vmatmul.f32.gmra.mxu0 %v106
    %v132 = vpop.f32.mrf.mxu0
    %v133 = vadd.f32 %v96, %v132
    %134 = vdwg.mxu0
    %vm135 = vcmask 130048
    %v136 = vsel %vm135, %v130, -inf
    %137 = vmax.xlane.f32.xlu0 %v136
    %v138 = vpop.xlane.xlu0 %137
    %v139 = vsel %vm135, %v133, -inf
    %140 = vmax.xlane.f32.xlu0 %v139
    %v141 = vpop.xlane.xlu0 %140
    %v142 = vsub.f32 %v130, %v138
    %v143 = vsub.f32 %v133, %v141
    %v144 = vmul.f32 %v142, 1.442695
    %v145 = vpow.pop %v144
    %v146 = vmul.f32 %v143, 1.442695
    %v147 = vpow.pop %v146
    %v149 = vsel %vm135, %v145, 0
    %v152 = vsel %vm135, %v147, 0
    %154 = vmatpush.msra.mxu0 0.0
    %155 = vmatpush.msra.mxu0 0.0
    %156 = vmatpush.msra.mxu0 0.0
    %157 = vmatpush.msra.mxu0 0.0
    %158 = vmatpush.msra.mxu0 0.0
    %159 = vmatpush.msra.mxu0 0.0
    %160 = vmatpush.msra.mxu0 0.0
    %161 = vmatpush.msra.mxu0 0.0
    %162 = vmatpush.msra.mxu0 0.0
    %163 = vmatpush.msra.mxu0 0.0
    %164 = vmatpush.msra.mxu0 0.0
    %165 = vmatpush.msra.mxu0 0.0
    %166 = vmatpush.msra.mxu0 0.0
    %167 = vmatpush.msra.mxu0 0.0
    %168 = vmatpush.msra.mxu0 %v93
    %169 = vmatpush.msra.mxu0 %v91
    %170 = vmatmul.f32.gmra.mxu0 %v149
    %v171 = vpop.f32.mrf.mxu0
    %v172 = vadd.f32 0.0, %v171
    %173 = vmatmul.f32.gmra.mxu0 %v152
    %v174 = vpop.f32.mrf.mxu0
    %v175 = vadd.f32 0.0, %v174
    %176 = vdwg.mxu0
    %v177 = vsel %vm135, %v145, 0.0
    %178 = vadd.xlane.f32.xlu0 %v177
    %v179 = vpop.xlane.xlu0 %178
    %v180 = vsel %vm135, %v147, 0.0
    %181 = vadd.xlane.f32.xlu0 %v180
    %v182 = vpop.xlane.xlu0 %181
    %v183 = vrcp.pop %v179
    %v184 = vrcp.pop %v182
    %v185 = vmul.f32 %v172, %v183
    %v186 = vmul.f32 %v175, %v184
    %187 = vrot.lane.b32.xlu0 %v56, 120
    %v188 = vpop.permute.xlu0 %187
    %189 = vrot.lane.b32.xlu0 %v58, 120
    %v190 = vpop.permute.xlu0 %189
    %191 = vrot.lane.b32.xlu0 %v56, 88
    %v192 = vpop.permute.xlu0 %191
    %193 = vrot.lane.b32.xlu0 %v58, 88
    %v194 = vpop.permute.xlu0 %193
    %v195 = vsel %vm103, %v188, 0
    %v197 = vsel %vm103, %v190, 0
    %v199 = vsel %vm103, %v192, 0
    %v201 = vsel %vm103, %v194, 0
    %203 = vmatpush.xpose.msra.mxu0 0.0
    %204 = vmatpush.xpose.msra.mxu0 0.0
    %205 = vmatpush.xpose.msra.mxu0 0.0
    %206 = vmatpush.xpose.msra.mxu0 0.0
    %207 = vmatpush.xpose.msra.mxu0 0.0
    %208 = vmatpush.xpose.msra.mxu0 0.0
    %209 = vmatpush.xpose.msra.mxu0 0.0
    %210 = vmatpush.xpose.msra.mxu0 0.0
    %211 = vmatpush.xpose.msra.mxu0 0.0
    %212 = vmatpush.xpose.msra.mxu0 0.0
    %213 = vmatpush.xpose.msra.mxu0 0.0
    %214 = vmatpush.xpose.msra.mxu0 0.0
    %215 = vmatpush.xpose.msra.mxu0 0.0
    %216 = vmatpush.xpose.msra.mxu0 0.0
    %217 = vmatpush.xpose.msra.mxu0 %v201
    %218 = vmatpush.xpose.msra.mxu0 %v199
    %219 = vmatmul.f32.gmra.mxu0 %v195
    %v220 = vpop.f32.mrf.mxu0
    %v221 = vadd.f32 %v95, %v220
    %222 = vmatmul.f32.gmra.mxu0 %v197
    %v223 = vpop.f32.mrf.mxu0
    %v224 = vadd.f32 %v96, %v223
    %225 = vdwg.mxu0
    %v226 = vsel %vm135, %v221, -inf
    %227 = vmax.xlane.f32.xlu0 %v226
    %v228 = vpop.xlane.xlu0 %227
    %v229 = vsel %vm135, %v224, -inf
    %230 = vmax.xlane.f32.xlu0 %v229
    %v231 = vpop.xlane.xlu0 %230
    %v232 = vsub.f32 %v221, %v228
    %v233 = vsub.f32 %v224, %v231
    %v234 = vmul.f32 %v232, 1.442695
    %v235 = vpow.pop %v234
    %v236 = vmul.f32 %v233, 1.442695
    %v237 = vpow.pop %v236
    %240 = vrot.lane.b32.xlu0 %v91, 120
    %v241 = vpop.permute.xlu0 %240
    %242 = vrot.lane.b32.xlu0 %v93, 120
    %v243 = vpop.permute.xlu0 %242
    %v247 = vsel %vm135, %v235, 0
    %v250 = vsel %vm135, %v237, 0
    %252 = vmatpush.msra.mxu0 0.0
    %253 = vmatpush.msra.mxu0 0.0
    %254 = vmatpush.msra.mxu0 0.0
    %255 = vmatpush.msra.mxu0 0.0
    %256 = vmatpush.msra.mxu0 0.0
    %257 = vmatpush.msra.mxu0 0.0
    %258 = vmatpush.msra.mxu0 0.0
    %259 = vmatpush.msra.mxu0 0.0
    %260 = vmatpush.msra.mxu0 0.0
    %261 = vmatpush.msra.mxu0 0.0
    %262 = vmatpush.msra.mxu0 0.0
    %263 = vmatpush.msra.mxu0 0.0
    %264 = vmatpush.msra.mxu0 0.0
    %265 = vmatpush.msra.mxu0 0.0
    %266 = vmatpush.msra.mxu0 %v243
    %267 = vmatpush.msra.mxu0 %v241
    %268 = vmatmul.f32.gmra.mxu0 %v247
    %v269 = vpop.f32.mrf.mxu0
    %v270 = vadd.f32 0.0, %v269
    %271 = vmatmul.f32.gmra.mxu0 %v250
    %v272 = vpop.f32.mrf.mxu0
    %v273 = vadd.f32 0.0, %v272
    %274 = vdwg.mxu0
    %v275 = vsel %vm135, %v235, 0.0
    %276 = vadd.xlane.f32.xlu0 %v275
    %v277 = vpop.xlane.xlu0 %276
    %v278 = vsel %vm135, %v237, 0.0
    %279 = vadd.xlane.f32.xlu0 %v278
    %v280 = vpop.xlane.xlu0 %279
    %v281 = vrcp.pop %v277
    %v282 = vrcp.pop %v280
    %v283 = vmul.f32 %v270, %v281
    %v284 = vmul.f32 %v273, %v282
    %285 = vrot.lane.b32.xlu0 %v56, 112
    %v286 = vpop.permute.xlu0 %285
    %287 = vrot.lane.b32.xlu0 %v58, 112
    %v288 = vpop.permute.xlu0 %287
    %289 = vrot.lane.b32.xlu0 %v56, 80
    %v290 = vpop.permute.xlu0 %289
    %291 = vrot.lane.b32.xlu0 %v58, 80
    %v292 = vpop.permute.xlu0 %291
    %v293 = vsel %vm103, %v286, 0
    %v295 = vsel %vm103, %v288, 0
    %v297 = vsel %vm103, %v290, 0
    %v299 = vsel %vm103, %v292, 0
    %301 = vmatpush.xpose.msra.mxu0 0.0
    %302 = vmatpush.xpose.msra.mxu0 0.0
    %303 = vmatpush.xpose.msra.mxu0 0.0
    %304 = vmatpush.xpose.msra.mxu0 0.0
    %305 = vmatpush.xpose.msra.mxu0 0.0
    %306 = vmatpush.xpose.msra.mxu0 0.0
    %307 = vmatpush.xpose.msra.mxu0 0.0
    %308 = vmatpush.xpose.msra.mxu0 0.0
    %309 = vmatpush.xpose.msra.mxu0 0.0
    %310 = vmatpush.xpose.msra.mxu0 0.0
    %311 = vmatpush.xpose.msra.mxu0 0.0
    %312 = vmatpush.xpose.msra.mxu0 0.0
    %313 = vmatpush.xpose.msra.mxu0 0.0
    %314 = vmatpush.xpose.msra.mxu0 0.0
    %315 = vmatpush.xpose.msra.mxu0 %v299
    %316 = vmatpush.xpose.msra.mxu0 %v297
    %317 = vmatmul.f32.gmra.mxu0 %v293
    %v318 = vpop.f32.mrf.mxu0
    %v319 = vadd.f32 %v95, %v318
    %320 = vmatmul.f32.gmra.mxu0 %v295
    %v321 = vpop.f32.mrf.mxu0
    %v322 = vadd.f32 %v96, %v321
    %323 = vdwg.mxu0
    %v324 = vsel %vm135, %v319, -inf
    %325 = vmax.xlane.f32.xlu0 %v324
    %v326 = vpop.xlane.xlu0 %325
    %v327 = vsel %vm135, %v322, -inf
    %328 = vmax.xlane.f32.xlu0 %v327
    %v329 = vpop.xlane.xlu0 %328
    %v330 = vsub.f32 %v319, %v326
    %v331 = vsub.f32 %v322, %v329
    %v332 = vmul.f32 %v330, 1.442695
    %v333 = vpow.pop %v332
    %v334 = vmul.f32 %v331, 1.442695
    %v335 = vpow.pop %v334
    %336 = vrot.lane.b32.xlu0 %v91, 112
    %v337 = vpop.permute.xlu0 %336
    %338 = vrot.lane.b32.xlu0 %v93, 112
    %v339 = vpop.permute.xlu0 %338
    %v343 = vsel %vm135, %v333, 0
    %v346 = vsel %vm135, %v335, 0
    %348 = vmatpush.msra.mxu0 0.0
    %349 = vmatpush.msra.mxu0 0.0
    %350 = vmatpush.msra.mxu0 0.0
    %351 = vmatpush.msra.mxu0 0.0
    %352 = vmatpush.msra.mxu0 0.0
    %353 = vmatpush.msra.mxu0 0.0
    %354 = vmatpush.msra.mxu0 0.0
    %355 = vmatpush.msra.mxu0 0.0
    %356 = vmatpush.msra.mxu0 0.0
    %357 = vmatpush.msra.mxu0 0.0
    %358 = vmatpush.msra.mxu0 0.0
    %359 = vmatpush.msra.mxu0 0.0
    %360 = vmatpush.msra.mxu0 0.0
    %361 = vmatpush.msra.mxu0 0.0
    %362 = vmatpush.msra.mxu0 %v339
    %363 = vmatpush.msra.mxu0 %v337
    %364 = vmatmul.f32.gmra.mxu0 %v343
    %v365 = vpop.f32.mrf.mxu0
    %v366 = vadd.f32 0.0, %v365
    %367 = vmatmul.f32.gmra.mxu0 %v346
    %v368 = vpop.f32.mrf.mxu0
    %v369 = vadd.f32 0.0, %v368
    %370 = vdwg.mxu0
    %v371 = vsel %vm135, %v333, 0.0
    %372 = vadd.xlane.f32.xlu0 %v371
    %v373 = vpop.xlane.xlu0 %372
    %v374 = vsel %vm135, %v335, 0.0
    %375 = vadd.xlane.f32.xlu0 %v374
    %v376 = vpop.xlane.xlu0 %375
    %v377 = vrcp.pop %v373
    %v378 = vrcp.pop %v376
    %v379 = vmul.f32 %v366, %v377
    %v380 = vmul.f32 %v369, %v378
    %381 = vrot.lane.b32.xlu0 %v56, 104
    %v382 = vpop.permute.xlu0 %381
    %383 = vrot.lane.b32.xlu0 %v58, 104
    %v384 = vpop.permute.xlu0 %383
    %385 = vrot.lane.b32.xlu0 %v56, 72
    %v386 = vpop.permute.xlu0 %385
    %387 = vrot.lane.b32.xlu0 %v58, 72
    %v388 = vpop.permute.xlu0 %387
    %v389 = vsel %vm103, %v382, 0
    %v391 = vsel %vm103, %v384, 0
    %v393 = vsel %vm103, %v386, 0
    %v395 = vsel %vm103, %v388, 0
    %397 = vmatpush.xpose.msra.mxu0 0.0
    %398 = vmatpush.xpose.msra.mxu0 0.0
    %399 = vmatpush.xpose.msra.mxu0 0.0
    %400 = vmatpush.xpose.msra.mxu0 0.0
    %401 = vmatpush.xpose.msra.mxu0 0.0
    %402 = vmatpush.xpose.msra.mxu0 0.0
    %403 = vmatpush.xpose.msra.mxu0 0.0
    %404 = vmatpush.xpose.msra.mxu0 0.0
    %405 = vmatpush.xpose.msra.mxu0 0.0
    %406 = vmatpush.xpose.msra.mxu0 0.0
    %407 = vmatpush.xpose.msra.mxu0 0.0
    %408 = vmatpush.xpose.msra.mxu0 0.0
    %409 = vmatpush.xpose.msra.mxu0 0.0
    %410 = vmatpush.xpose.msra.mxu0 0.0
    %411 = vmatpush.xpose.msra.mxu0 %v395
    %412 = vmatpush.xpose.msra.mxu0 %v393
    %413 = vmatmul.f32.gmra.mxu0 %v389
    %v414 = vpop.f32.mrf.mxu0
    %v415 = vadd.f32 %v95, %v414
    %416 = vmatmul.f32.gmra.mxu0 %v391
    %v417 = vpop.f32.mrf.mxu0
    %v418 = vadd.f32 %v96, %v417
    %419 = vdwg.mxu0
    %v420 = vsel %vm135, %v415, -inf
    %421 = vmax.xlane.f32.xlu0 %v420
    %v422 = vpop.xlane.xlu0 %421
    %v423 = vsel %vm135, %v418, -inf
    %424 = vmax.xlane.f32.xlu0 %v423
    %v425 = vpop.xlane.xlu0 %424
    %v426 = vsub.f32 %v415, %v422
    %v427 = vsub.f32 %v418, %v425
    %v428 = vmul.f32 %v426, 1.442695
    %v429 = vpow.pop %v428
    %v430 = vmul.f32 %v427, 1.442695
    %v431 = vpow.pop %v430
    %432 = vrot.lane.b32.xlu0 %v91, 104
    %v433 = vpop.permute.xlu0 %432
    %434 = vrot.lane.b32.xlu0 %v93, 104
    %v435 = vpop.permute.xlu0 %434
    %v439 = vsel %vm135, %v429, 0
    %v442 = vsel %vm135, %v431, 0
    %444 = vmatpush.msra.mxu0 0.0
    %445 = vmatpush.msra.mxu0 0.0
    %446 = vmatpush.msra.mxu0 0.0
    %447 = vmatpush.msra.mxu0 0.0
    %448 = vmatpush.msra.mxu0 0.0
    %449 = vmatpush.msra.mxu0 0.0
    %450 = vmatpush.msra.mxu0 0.0
    %451 = vmatpush.msra.mxu0 0.0
    %452 = vmatpush.msra.mxu0 0.0
    %453 = vmatpush.msra.mxu0 0.0
    %454 = vmatpush.msra.mxu0 0.0
    %455 = vmatpush.msra.mxu0 0.0
    %456 = vmatpush.msra.mxu0 0.0
    %457 = vmatpush.msra.mxu0 0.0
    %458 = vmatpush.msra.mxu0 %v435
    %459 = vmatpush.msra.mxu0 %v433
    %460 = vmatmul.f32.gmra.mxu0 %v439
    %v461 = vpop.f32.mrf.mxu0
    %v462 = vadd.f32 0.0, %v461
    %463 = vmatmul.f32.gmra.mxu0 %v442
    %v464 = vpop.f32.mrf.mxu0
    %v465 = vadd.f32 0.0, %v464
    %466 = vdwg.mxu0
    %v467 = vsel %vm135, %v429, 0.0
    %468 = vadd.xlane.f32.xlu0 %v467
    %v469 = vpop.xlane.xlu0 %468
    %v470 = vsel %vm135, %v431, 0.0
    %471 = vadd.xlane.f32.xlu0 %v470
    %v472 = vpop.xlane.xlu0 %471
    %v473 = vrcp.pop %v469
    %v474 = vrcp.pop %v472
    %v475 = vmul.f32 %v462, %v473
    %v476 = vmul.f32 %v465, %v474
    %479 = vrot.lane.b32.xlu0 %v283, 8
    %v480 = vpop.permute.xlu0 %479
    %481 = vrot.lane.b32.xlu0 %v284, 8
    %v482 = vpop.permute.xlu0 %481
    %487 = vrot.lane.b32.xlu0 %v379, 16
    %v488 = vpop.permute.xlu0 %487
    %489 = vrot.lane.b32.xlu0 %v380, 16
    %v490 = vpop.permute.xlu0 %489
    %495 = vrot.lane.b32.xlu0 %v475, 24
    %v496 = vpop.permute.xlu0 %495
    %497 = vrot.lane.b32.xlu0 %v476, 24
    %v498 = vpop.permute.xlu0 %497
    %v501 = vsel %vm103, %v185, %v480
    %v502 = vsel %vm103, %v186, %v482
    %v503 = vsel %vm135, %v501, %v488
    %v504 = vsel %vm135, %v502, %v490
    %vm505 = vcmask 195584
    %v506 = vsel %vm505, %v503, %v496
    %v507 = vsel %vm505, %v504, %v498
    %v508 = vpack.c.bf16 %v507, %v506
    %v509 = vld [vmem:[%s1 + $0x20] sm:$0xf]
    %v510 = vld [vmem:[%s1 + $0x24] sm:$0xf]
    %v511 = vld [vmem:[%s1 + $0x28] sm:$0xf]
    %v512 = vld [vmem:[%s1 + $0x2c] sm:$0xf]
    %v517 = vunpack.c.l.b16 %v509
    %v518 = vunpack.c.l.b16 %v510
    %v519 = vunpack.c.l.b16 %v511
    %v520 = vunpack.c.l.b16 %v512
    %v521 = vpack.c.b16 %v518, %v517
    %v522 = vpack.c.b16 %v520, %v519
    %526 = vrot.lane.b32.xlu0 %v65, 96
    %v527 = vpop.permute.xlu0 %526
    %v530 = vsel %vm42, %v508, 0
    %532 = vmatpush.bf16.msra.mxu0 0
    %533 = vmatpush.bf16.msra.mxu0 0
    %534 = vmatpush.bf16.msra.mxu0 0
    %535 = vmatpush.bf16.msra.mxu0 0
    %536 = vmatpush.bf16.msra.mxu0 0
    %537 = vmatpush.bf16.msra.mxu0 0
    %538 = vmatpush.bf16.msra.mxu0 %v522
    %539 = vmatpush.bf16.msra.mxu0 %v521
    %540 = vmatmul.bf16.gmra.mxu0 %v530
    %v541 = vpop.f32.mrf.mxu0
    %v542 = vadd.f32 %v527, %v541
    %v543 = vpop.f32.mrf.mxu0
    %v544 = vadd.f32 %v527, %v543
    %545 = vdwg.mxu0
    %v546 = vadd.f32 %v16, %v542
    %v547 = vadd.f32 %v17, %v544
    %v548 = vsel %vm42, %v546, 0.0
    %549 = vadd.xlane.f32.xlu0 %v548
    %v550 = vpop.xlane.xlu0 %549
    %v551 = vsel %vm42, %v547, 0.0
    %552 = vadd.xlane.f32.xlu0 %v551
    %v553 = vpop.xlane.xlu0 %552
    %v554 = vrcp.pop 32.0
    %v555 = vmul.f32 32.0, %v554
    %v556 = vsub.f32 1.0, %v555
    %v557 = vmul.f32 %v554, %v556
    %v558 = vadd.f32 %v554, %v557
    %vm559 = vweird.f32 %v554
    %v560 = vsel %vm559, %v554, %v558
    %v561 = vmul.f32 %v550, %v560
    %v562 = vmul.f32 %v553, %v560
    %v563 = vsub.f32 %v546, %v561
    %v564 = vsub.f32 %v547, %v562
    %v565 = vmul.f32 %v563, %v563
    %v566 = vmul.f32 %v564, %v564
    %v567 = vsel %vm42, %v565, 0.0
    %568 = vadd.xlane.f32.xlu0 %v567
    %v569 = vpop.xlane.xlu0 %568
    %v570 = vsel %vm42, %v566, 0.0
    %571 = vadd.xlane.f32.xlu0 %v570
    %v572 = vpop.xlane.xlu0 %571
    %v573 = vmul.f32 %v569, %v560
    %v574 = vmul.f32 %v572, %v560
    %v575 = vadd.f32 %v573, 1e-05
    %v576 = vadd.f32 %v574, 1e-05
    %v577 = vrsqrt.pop %v575
    %v578 = vmul.f32 %v577, %v575
    %v579 = vmul.f32 %v578, %v577
    %v580 = vmul.f32 0.5, %v579
    %v581 = vsub.f32 1.5, %v580
    %v582 = vmul.f32 %v577, %v581
    %vm583 = vweird.f32 %v575
    %vm584 = vweird.f32 %v577
    %vm585 = vmor %vm583, %vm584
    %v586 = vsel %vm585, %v577, %v582
    %v587 = vrsqrt.pop %v576
    %v588 = vmul.f32 %v587, %v576
    %v589 = vmul.f32 %v588, %v587
    %v590 = vmul.f32 0.5, %v589
    %v591 = vsub.f32 1.5, %v590
    %v592 = vmul.f32 %v587, %v591
    %vm593 = vweird.f32 %v576
    %vm594 = vweird.f32 %v587
    %vm595 = vmor %vm593, %vm594
    %v596 = vsel %vm595, %v587, %v592
    %v597 = vmul.f32 %v563, %v586
    %v598 = vmul.f32 %v564, %v596
    %v599 = vld [vmem:[%s2 + $0x2] sm:$0x1]
    %v600 = vperm.slane %v599, 0
    %v601 = vmul.f32 %v597, %v600
    %v602 = vmul.f32 %v598, %v600
    %604 = vrot.lane.b32.xlu0 %v600, 96
    %v605 = vpop.permute.xlu0 %604
    %v607 = vadd.f32 %v601, %v605
    %v608 = vadd.f32 %v602, %v605
    %v609 = vpack.c.bf16 %v608, %v607
    %v610 = vld [vmem:[%s1 + $0x30] sm:$0xf]
    %v611 = vld [vmem:[%s1 + $0x34] sm:$0xf]
    %v612 = vld [vmem:[%s1 + $0x38] sm:$0xf]
    %v613 = vld [vmem:[%s1 + $0x3c] sm:$0xf]
    %v614 = vld [vmem:[%s2 + $0x4] sm:$0x1]
    %v615 = vperm.slane %v614, 0
    %v620 = vunpack.c.l.b16 %v610
    %v621 = vunpack.c.l.b16 %v611
    %v622 = vunpack.c.l.b16 %v612
    %v623 = vunpack.c.l.b16 %v613
    %v624 = vpack.c.b16 %v621, %v620
    %v625 = vpack.c.b16 %v623, %v622
    %v629 = vsel %vm42, %v609, 0
    %631 = vmatpush.bf16.msra.mxu0 0
    %632 = vmatpush.bf16.msra.mxu0 0
    %633 = vmatpush.bf16.msra.mxu0 0
    %634 = vmatpush.bf16.msra.mxu0 0
    %635 = vmatpush.bf16.msra.mxu0 0
    %636 = vmatpush.bf16.msra.mxu0 0
    %637 = vmatpush.bf16.msra.mxu0 %v625
    %638 = vmatpush.bf16.msra.mxu0 %v624
    %639 = vmatmul.bf16.gmra.mxu0 %v629
    %v640 = vpop.f32.mrf.mxu0
    %v641 = vadd.f32 %v615, %v640
    %v642 = vpop.f32.mrf.mxu0
    %v643 = vadd.f32 %v615, %v642
    %644 = vdwg.mxu0
    %v645 = vmax.f32 %v641, 0.0
    %v646 = vmax.f32 %v643, 0.0
    %v647 = vpack.c.bf16 %v646, %v645
    %v648 = vld [vmem:[%s1 + $0x40] sm:$0xf]
    %v649 = vld [vmem:[%s1 + $0x44] sm:$0xf]
    %v650 = vld [vmem:[%s1 + $0x48] sm:$0xf]
    %v651 = vld [vmem:[%s1 + $0x4c] sm:$0xf]
    %v652 = vld [vmem:[%s1 + $0x50] sm:$0xf]
    %v653 = vld [vmem:[%s1 + $0x54] sm:$0xf]
    %v654 = vld [vmem:[%s1 + $0x58] sm:$0xf]
    %v655 = vld [vmem:[%s1 + $0x5c] sm:$0xf]
    %v656 = vld [vmem:[%s2 + $0x5] sm:$0x1]
    %v657 = vperm.slane %v656, 0
    %v666 = vunpack.c.l.b16 %v648
    %v667 = vunpack.c.l.b16 %v649
    %v668 = vunpack.c.l.b16 %v650
    %v669 = vunpack.c.l.b16 %v651
    %v670 = vunpack.c.l.b16 %v652
    %v671 = vunpack.c.l.b16 %v653
    %v672 = vunpack.c.l.b16 %v654
    %v673 = vunpack.c.l.b16 %v655
    %v674 = vpack.c.b16 %v667, %v666
    %v675 = vpack.c.b16 %v669, %v668
    %v676 = vpack.c.b16 %v671, %v670
    %v677 = vpack.c.b16 %v673, %v672
    %vm682 = vcmask 523264
    %v684 = vsel %vm682, %v647, 0
    %686 = vmatpush.bf16.msra.mxu0 0
    %687 = vmatpush.bf16.msra.mxu0 0
    %688 = vmatpush.bf16.msra.mxu0 0
    %689 = vmatpush.bf16.msra.mxu0 0
    %690 = vmatpush.bf16.msra.mxu0 %v677
    %691 = vmatpush.bf16.msra.mxu0 %v676
    %692 = vmatpush.bf16.msra.mxu0 %v675
    %693 = vmatpush.bf16.msra.mxu0 %v674
    %694 = vmatmul.bf16.gmra.mxu0 %v684
    %v695 = vpop.f32.mrf.mxu0
    %v696 = vadd.f32 %v657, %v695
    %v697 = vpop.f32.mrf.mxu0
    %v698 = vadd.f32 %v657, %v697
    %699 = vdwg.mxu0
    %v700 = vadd.f32 %v607, %v696
    %v701 = vadd.f32 %v608, %v698
    %v702 = vsel %vm42, %v700, 0.0
    %703 = vadd.xlane.f32.xlu0 %v702
    %v704 = vpop.xlane.xlu0 %703
    %v705 = vsel %vm42, %v701, 0.0
    %706 = vadd.xlane.f32.xlu0 %v705
    %v707 = vpop.xlane.xlu0 %706
    %v708 = vmul.f32 %v704, %v560
    %v709 = vmul.f32 %v707, %v560
    %v710 = vsub.f32 %v700, %v708
    %v711 = vsub.f32 %v701, %v709
    %v712 = vmul.f32 %v710, %v710
    %v713 = vmul.f32 %v711, %v711
    %v714 = vsel %vm42, %v712, 0.0
    %715 = vadd.xlane.f32.xlu0 %v714
    %v716 = vpop.xlane.xlu0 %715
    %v717 = vsel %vm42, %v713, 0.0
    %718 = vadd.xlane.f32.xlu0 %v717
    %v719 = vpop.xlane.xlu0 %718
    %v720 = vmul.f32 %v716, %v560
    %v721 = vmul.f32 %v719, %v560
    %v722 = vadd.f32 %v720, 1e-05
    %v723 = vadd.f32 %v721, 1e-05
    %v724 = vrsqrt.pop %v722
    %v725 = vmul.f32 %v724, %v722
    %v726 = vmul.f32 %v725, %v724
    %v727 = vmul.f32 0.5, %v726
    %v728 = vsub.f32 1.5, %v727
    %v729 = vmul.f32 %v724, %v728
    %vm730 = vweird.f32 %v722
    %vm731 = vweird.f32 %v724
    %vm732 = vmor %vm730, %vm731
    %v733 = vsel %vm732, %v724, %v729
    %v734 = vrsqrt.pop %v723
    %v735 = vmul.f32 %v734, %v723
    %v736 = vmul.f32 %v735, %v734
    %v737 = vmul.f32 0.5, %v736
    %v738 = vsub.f32 1.5, %v737
    %v739 = vmul.f32 %v734, %v738
    %vm740 = vweird.f32 %v723
    %vm741 = vweird.f32 %v734
    %vm742 = vmor %vm740, %vm741
    %v743 = vsel %vm742, %v734, %v739
    %v744 = vmul.f32 %v710, %v733
    %v745 = vmul.f32 %v711, %v743
    %v746 = vld [vmem:[%s2 + $0x3] sm:$0x1]
    %v747 = vperm.slane %v746, 0
    %v748 = vmul.f32 %v744, %v747
    %v749 = vmul.f32 %v745, %v747
    %751 = vrot.lane.b32.xlu0 %v747, 96
    %v752 = vpop.permute.xlu0 %751
    %v754 = vadd.f32 %v748, %v752
    %v755 = vadd.f32 %v749, %v752
    %756 = vst.msk [vmem:[#allocation2] sm:$0xff] %vm42, %v754
    %757 = vst.msk [vmem:[#allocation2 + $0x8] sm:$0xff] %vm42, %v755
    // Predicated region
    $region14: #{transformer_encoder_layer.1} parent=1 // pred_check
      _
    $region15: #{transformer_encoder_layer.1} parent=1 // pred_check_branch
      %759 = sbr.rel (0) target = $region17
    $region16: #{transformer_encoder_layer.1} parent=1 // pred_region
      %761 = vsyncadd [#allocation3], 0
      %s762 = sshll.u32 [#allocation2], 4
      %s763 = int_to_ptr.vmem [resolvable:$true] %s762
      %s764 = sshll.u32 %s3, 4
      %s765 = int_to_ptr.hbm [resolvable:$true] %s764
      %770 = dma.vmem_to_hbm [thread:$0]  %s763, 256, %s765, [#allocation3], 128, 128, 8
    $region17: #{transformer_encoder_layer.1} parent=1 // pred_fallthru
      _
    // Predicated region
    $region18: #{transformer_encoder_layer.1} parent=1 // pred_check
      _
    $region19: #{transformer_encoder_layer.1} parent=1 // pred_check_branch
      %772 = sbr.rel (0) target = $region21
    $region20: #{transformer_encoder_layer.1} parent=1 // pred_region
      %774 = dma.done [#allocation3], 256
    $region21: #{transformer_encoder_layer.1} parent=1 // pred_fallthru
      _
    %775 = vsyncpa [#allocation3], 1

</llo_original>
